<compile_context>
chip_gen: v5e
topology: v5e:2x2
jax: 0.10.0
libtpu: 0.0.40
codegen_flags: <defaults>
</compile_context>

<pallas_src>
import functools

import jax
import jax.numpy as jnp
from jax.experimental import pallas as pl
from jax.experimental.pallas import tpu as pltpu


def _xheight_cc_loss_kernel(height_importance, inv_count, n_rows, hw, needs_mask,
                            p_ref, y_ref, o_ref, acc_ref):
    """Streaming per-channel squared-error reduction over the batch grid axis.

    p_ref, y_ref : (TB, 2*H*W) tiles (channel 0 = cols [0:hw], channel 1 = cols [hw:2*hw])
    acc_ref      : (TB, 2*H*W) f32 VMEM accumulator (element-wise adds only per step)
    o_ref        : (1,) f32 SMEM scalar output
    """
    step = pl.program_id(0)
    tb = acc_ref.shape[0]

    diff = p_ref[...].astype(jnp.float32) - y_ref[...].astype(jnp.float32)
    sq = diff * diff

    if needs_mask:
        # Zero out rows of the last (partial) batch block that fall past the real batch.
        row_ids = jax.lax.broadcasted_iota(jnp.int32, (tb, 1), 0) + step * tb
        sq = jnp.where(row_ids < n_rows, sq, 0.0)

    @pl.when(step == 0)
    def _():
        acc_ref[...] = jnp.zeros_like(acc_ref)

    acc_ref[...] += sq          # VPU-only steady state (no per-step cross-lane reduce)

    @pl.when(step == pl.num_programs(0) - 1)
    def _():
        acc = acc_ref[...]
        s0 = jnp.sum(acc[:, :hw])           # channel 0 (baseline presence)
        s1 = jnp.sum(acc[:, hw:2 * hw])     # channel 1 (x-height)
        o_ref[0] = s0 * inv_count + height_importance * (s1 * inv_count)


def xheight_cc_loss(predicted, y_true, height_importance=1.0,
                    *, batch_block=None, force_pallas=False):
    """loss = MSE(pred[:,0], true[:,0]) + height_importance * MSE(pred[:,1], true[:,1])."""
    N, C, H, W = predicted.shape
    assert y_true.shape == predicted.shape
    assert C >= 2, "XHeightCCLoss needs at least 2 channels (baseline + height)"

    hw = H * W
    row = 2 * hw                       # elements of the two used channels per batch row

    # Tiny problems: fused XLA reduction beats pallas_call launch / per-step overhead.
    if not force_pallas and (N * row * 4) < (1 << 20):
        p32 = predicted.astype(jnp.float32)
        y32 = y_true.astype(jnp.float32)
        return (jnp.mean((p32[:, 0] - y32[:, 0]) ** 2)
                + height_importance * jnp.mean((p32[:, 1] - y32[:, 1]) ** 2))

    # Lane-dense flattening: (N, C, H, W) -> (N, C*H*W). Channels 0..1 are the leading
    # 2*H*W elements of each row, so a (TB, 2*H*W) block only DMAs the two used channels.
    if C == 2 or row % 128 == 0:
        p_flat = predicted.reshape(N, C * hw)
        y_flat = y_true.reshape(N, C * hw)
    else:
        # Odd spatial sizes: materialize the 2-channel slice so the block's last dim equals
        # the full (flattened) array dim, which is always a legal BlockSpec shape.
        p_flat = predicted[:, :2].reshape(N, row)
        y_flat = y_true[:, :2].reshape(N, row)

    # Pick the batch block: target ~2 MiB per-input f32 tile.  Total VMEM is then roughly
    # 2 inputs x 2 pipeline buffers x 2 MiB + 2 MiB accumulator ~= 10 MiB, which fits the
    # scoped-VMEM budgets on v5e (16 MiB default), v6e (32 MiB) and v7x (32 of 64 MiB).
    if batch_block is None:
        target_bytes = 2 * 1024 * 1024
        tb = max(1, target_bytes // (row * 4))
    else:
        tb = int(batch_block)
    if tb >= N:
        tb = N                              # full batch dim is always a legal block size
    else:
        tb = max(8, (tb // 8) * 8)          # sublane-aligned second-to-last block dim
        tb = min(tb, N)
        if tb < N and tb % 8 != 0:
            tb = N
    grid = pl.cdiv(N, tb)
    needs_mask = (N % tb) != 0

    inv_count = 1.0 / float(N * hw)         # MSE reduction='mean' over (N, H, W) per channel
    kernel = functools.partial(
        _xheight_cc_loss_kernel,
        float(height_importance), float(inv_count), int(N), int(hw), bool(needs_mask))

    out = pl.pallas_call(
        kernel,
        out_shape=jax.ShapeDtypeStruct((1,), jnp.float32),
        grid_spec=pltpu.PrefetchScalarGridSpec(
            num_scalar_prefetch=0,
            grid=(grid,),
            in_specs=[
                pl.BlockSpec((tb, row), lambda n: (n, 0)),
                pl.BlockSpec((tb, row), lambda n: (n, 0)),
            ],
            out_specs=pl.BlockSpec(memory_space=pltpu.MemorySpace.SMEM),
            scratch_shapes=[pltpu.VMEM((tb, row), jnp.float32)],
        ),
        compiler_params=pltpu.CompilerParams(
            dimension_semantics=("arbitrary",),        # batch axis is a reduction
            vmem_limit_bytes=32 * 1024 * 1024,         # safe on v5e/v6e/v7x, covers tiles
        ),
    )(p_flat, y_flat)
    return out[0]


if __name__ == "__main__":
    key = jax.random.PRNGKey(0)

    def ref_loss(p, yt, hi):
        p = p.astype(jnp.float32)
        yt = yt.astype(jnp.float32)
        return (jnp.mean((p[:, 0] - yt[:, 0]) ** 2)
                + hi * jnp.mean((p[:, 1] - yt[:, 1]) ** 2))

    cases = [
        # (shape,             height_importance, batch_block)
        ((2, 4, 16, 16),      1.0,               None),  # lane-dense fast path, single block
        ((10, 3, 8, 16),      0.5,               8),     # multi-step grid + partial block mask
        ((3, 4, 6, 10),       2.0,               None),  # row not %128 -> fallback slice path
    ]

    for (shape, hi, bb) in cases:
        key, k1, k2 = jax.random.split(key, 3)
        predicted = jax.random.uniform(k1, shape, dtype=jnp.float32)
        y_true = jax.random.uniform(k2, shape, dtype=jnp.float32)

        loss = xheight_cc_loss(predicted, y_true, hi,
                               batch_block=bb, force_pallas=True)
        loss = jax.block_until_ready(loss)

        ref = ref_loss(predicted, y_true, hi)
        assert jnp.allclose(loss, ref, rtol=1e-5, atol=1e-6), (shape, loss, ref)

    print("KERNEL_OK")
</pallas_src>

<mosaic_0001>
module attributes {stable_mosaic.version = 11 : i64} {
  func.func @_xheight_cc_loss_kernel(%arg0: i32, %arg1: memref<2x512xf32, #tpu.memory_space<vmem>>, %arg2: memref<2x512xf32, #tpu.memory_space<vmem>>, %arg3: memref<1xf32, #tpu.memory_space<smem>>, %arg4: memref<2x512xf32, #tpu.memory_space<vmem>>) attributes {dimension_semantics = [#tpu.dimension_semantics<arbitrary>], iteration_bounds = array<i64: 1>, scalar_prefetch = 0 : i64, scratch_operands = 1 : i64, tpu.core_type = #tpu.core_type<tc>, window_params = [{transform_indices = @transform_0, window_bounds = array<i64: 2, 512>}, {transform_indices = @transform_1, window_bounds = array<i64: 2, 512>}, {transform_indices = @transform_2, window_bounds = array<i64: 1>}]} {
    %c0 = arith.constant 0 : index
    %c0_0 = arith.constant 0 : index
    %0 = vector.load %arg1[%c0, %c0_0] : memref<2x512xf32, #tpu.memory_space<vmem>>, vector<2x512xf32>
    %c0_1 = arith.constant 0 : index
    %c0_2 = arith.constant 0 : index
    %1 = vector.load %arg2[%c0_1, %c0_2] : memref<2x512xf32, #tpu.memory_space<vmem>>, vector<2x512xf32>
    %2 = arith.subf %0, %1 : vector<2x512xf32>
    %3 = arith.mulf %2, %2 : vector<2x512xf32>
    %c0_i32 = arith.constant 0 : i32
    %4 = arith.cmpi eq, %arg0, %c0_i32 : i32
    %5 = arith.extui %4 : i1 to i32
    %c0_i32_3 = arith.constant 0 : i32
    %6 = arith.cmpi ne, %5, %c0_i32_3 : i32
    scf.if %6 {
      %cst = arith.constant 0.000000e+00 : f32
      %13 = vector.broadcast %cst : f32 to vector<2x512xf32>
      %c0_10 = arith.constant 0 : index
      %c0_11 = arith.constant 0 : index
      %14 = vector.load %arg4[%c0_10, %c0_11] : memref<2x512xf32, #tpu.memory_space<vmem>>, vector<2x512xf32>
      tpu.vector_store %arg4[%c0_10, %c0_11], %13 {strides = array<i32>} : memref<2x512xf32, #tpu.memory_space<vmem>>, vector<2x512xf32>,
    } else {
    }
    %c0_4 = arith.constant 0 : index
    %c0_5 = arith.constant 0 : index
    %7 = vector.load %arg4[%c0_4, %c0_5] : memref<2x512xf32, #tpu.memory_space<vmem>>, vector<2x512xf32>
    %8 = arith.addf %7, %3 : vector<2x512xf32>
    %c0_6 = arith.constant 0 : index
    %c0_7 = arith.constant 0 : index
    %9 = vector.load %arg4[%c0_6, %c0_7] : memref<2x512xf32, #tpu.memory_space<vmem>>, vector<2x512xf32>
    tpu.vector_store %arg4[%c0_6, %c0_7], %8 {strides = array<i32>} : memref<2x512xf32, #tpu.memory_space<vmem>>, vector<2x512xf32>,
    %c0_i32_8 = arith.constant 0 : i32
    %10 = arith.cmpi eq, %arg0, %c0_i32_8 : i32
    %11 = arith.extui %10 : i1 to i32
    %c0_i32_9 = arith.constant 0 : i32
    %12 = arith.cmpi ne, %11, %c0_i32_9 : i32
    scf.if %12 {
      %c0_10 = arith.constant 0 : index
      %c0_11 = arith.constant 0 : index
      %13 = vector.load %arg4[%c0_10, %c0_11] : memref<2x512xf32, #tpu.memory_space<vmem>>, vector<2x512xf32>
      %14 = vector.extract_strided_slice %13 {offsets = [0, 0], sizes = [2, 256], strides = [1, 1]} : vector<2x512xf32> to vector<2x256xf32>
      %15 = vector.shape_cast %14 : vector<2x256xf32> to vector<1x2x256xf32>
      %cst = arith.constant dense<0.000000e+00> : vector<1xf32>
      %16 = vector.multi_reduction <add>, %15, %cst [1, 2] : vector<1x2x256xf32> to vector<1xf32>
      %17 = vector.shape_cast %16 : vector<1xf32> to vector<1x1x1xf32>
      %18 = vector.extract %17[0, 0, 0] : f32 from vector<1x1x1xf32>
      %19 = vector.extract_strided_slice %13 {offsets = [0, 256], sizes = [2, 256], strides = [1, 1]} : vector<2x512xf32> to vector<2x256xf32>
      %20 = vector.shape_cast %19 : vector<2x256xf32> to vector<1x2x256xf32>
      %cst_12 = arith.constant dense<0.000000e+00> : vector<1xf32>
      %21 = vector.multi_reduction <add>, %20, %cst_12 [1, 2] : vector<1x2x256xf32> to vector<1xf32>
      %22 = vector.shape_cast %21 : vector<1xf32> to vector<1x1x1xf32>
      %23 = vector.extract %22[0, 0, 0] : f32 from vector<1x1x1xf32>
      %cst_13 = arith.constant 0.001953125 : f32
      %24 = arith.mulf %18, %cst_13 : f32
      %cst_14 = arith.constant 0.001953125 : f32
      %25 = arith.mulf %23, %cst_14 : f32
      %cst_15 = arith.constant 1.000000e+00 : f32
      %26 = arith.mulf %cst_15, %25 : f32
      %27 = arith.addf %24, %26 : f32
      %c0_16 = arith.constant 0 : index
      %28 = memref.load %arg3[%c0_16] : memref<1xf32, #tpu.memory_space<smem>>
      memref.store %27, %arg3[%c0_16] : memref<1xf32, #tpu.memory_space<smem>>
    } else {
    }
    return
  }
  func.func @transform_0(%arg0: i32) -> (i32, i32) {
    %c0_i32 = arith.constant 0 : i32
    %c0_i32_0 = arith.constant 0 : i32
    return %arg0, %c0_i32 : i32, i32
  }
  func.func @transform_1(%arg0: i32) -> (i32, i32) {
    %c0_i32 = arith.constant 0 : i32
    %c0_i32_0 = arith.constant 0 : i32
    return %arg0, %c0_i32 : i32, i32
  }
  func.func @transform_2(%arg0: i32) -> i32 {
    %c0_i32 = arith.constant 0 : i32
    %c0_i32_0 = arith.constant 0 : i32
    return %c0_i32 : i32
  }
}

</mosaic_0001>

<llo_original>
// kernel: tpu_custom_call.1
$region0: #{tpu_custom_call.1}
  #allocation0 [shape = 'u32[]', space=smem, size = 0x4, offset = 0x4, fixed_abs, tag = 'smem constant byte address 0x4 - core index']
  #allocation1 [shape = 'u32[72,128]{1,0:T(1,128)}', space=vmem, size = 0x9000, scoped, tag = 'internal scratch']
  #allocation2 [shape = 'f32[2,512]{1,0:T(2,128)}', space=vmem, size = 0x1000, scoped, tag = 'scratch operand']
  %s0 = inlined_call_operand.hbm [shape: f32[2,1024], index: 0, kind: input, shape index: {}]
  %s1 = inlined_call_operand.hbm [shape: f32[2,1024], index: 1, kind: input, shape index: {}]
  %s2 = inlined_call_operand.hbm [shape: f32[1], index: 2, kind: output, shape index: {}]
  %s3 = sld [smem:[#allocation0]]
  $region34: #{tpu_custom_call.1} parent=0
    _
  %s5 = ssub.s32 1, %s3
  %s6 = scalar_select 0, %s5, %s3
  $region1: #{tpu_custom_call.1} parent=0
    #allocation3 [shape = 'u8[4096]{0}', space=vmem, size = 0x1000, scoped, tag = 'input window, operand 0, single buffered']
    #allocation4 [shape = 's32[1]{0}', space=sflag, size = 0x4, scoped, tag = 'scoped memory for tpu_custom_call.1']
    #allocation5 [shape = 's32[1]{0}', space=sflag, size = 0x4, scoped, tag = 'scoped memory for tpu_custom_call.1']
    #allocation6 [shape = 'u8[4096]{0}', space=vmem, size = 0x1000, scoped, tag = 'input window, operand 1, single buffered']
    #allocation7 [shape = 's32[1]{0}', space=sflag, size = 0x4, scoped, tag = 'scoped memory for tpu_custom_call.1']
    #allocation8 [shape = 'u8[512]{0}', space=smem, size = 0x200, scoped, tag = 'output window, operand 0, single buffered']
    %7 = vsyncpa [#allocation4], 0
    %8 = vsyncpa [#allocation7], 0
    %9 = vsyncpa [#allocation5], 0
    // Predicated region
    $region2: #{tpu_custom_call.1} parent=1 // pred_check
      _
    $region3: #{tpu_custom_call.1} parent=1 // pred_check_branch
      %11 = sbr.rel (0) target = $region5
    $region4: #{tpu_custom_call.1} parent=1 // pred_region
      %13 = vsyncadd [#allocation4], 0
      %s15 = sshll.u32 %s0, 4
      %s16 = int_to_ptr.hbm [resolvable:$true] %s15
      %s17 = sshll.u32 [#allocation3], 4
      %s18 = int_to_ptr.vmem [resolvable:$true] %s17
      %20 = dma.hbm_to_vmem [thread:$0]  %s16, 128, %s18, [#allocation4]
    $region5: #{tpu_custom_call.1} parent=1 // pred_fallthru
      _
    // Predicated region
    $region6: #{tpu_custom_call.1} parent=1 // pred_check
      _
    $region7: #{tpu_custom_call.1} parent=1 // pred_check_branch
      %22 = sbr.rel (0) target = $region9
    $region8: #{tpu_custom_call.1} parent=1 // pred_region
      %24 = vsyncadd [#allocation7], 0
      %s26 = sshll.u32 %s1, 4
      %s27 = int_to_ptr.hbm [resolvable:$true] %s26
      %s28 = sshll.u32 [#allocation6], 4
      %s29 = int_to_ptr.vmem [resolvable:$true] %s28
      %31 = dma.hbm_to_vmem [thread:$0]  %s27, 128, %s29, [#allocation7]
    $region9: #{tpu_custom_call.1} parent=1 // pred_fallthru
      _
    // Predicated region
    $region10: #{tpu_custom_call.1} parent=1 // pred_check
      _
    $region11: #{tpu_custom_call.1} parent=1 // pred_check_branch
      %33 = sbr.rel (0) target = $region13
    $region12: #{tpu_custom_call.1} parent=1 // pred_region
      %35 = dma.done [#allocation4], 128
    $region13: #{tpu_custom_call.1} parent=1 // pred_fallthru
      _
    // Predicated region
    $region14: #{tpu_custom_call.1} parent=1 // pred_check
      _
    $region15: #{tpu_custom_call.1} parent=1 // pred_check_branch
      %37 = sbr.rel (0) target = $region17
    $region16: #{tpu_custom_call.1} parent=1 // pred_region
      %39 = dma.done [#allocation7], 128
    $region17: #{tpu_custom_call.1} parent=1 // pred_fallthru
      _
    %v40 = vld [vmem:[#allocation3] sm:$0xff]
    %v41 = vld [vmem:[#allocation6] sm:$0xff]
    %v42 = vsub.f32 %v40, %v41
    %v43 = vmul.f32 %v42, %v42
    %p44 = scmp.eq.s32.totalorder 0, 0
    // Predicated region
    $region18: #{tpu_custom_call.1} parent=1 // pred_check
      %p45 = pneg %p44
    $region19: #{tpu_custom_call.1} parent=1 // pred_check_branch
      %47 = sbr.rel (%p45) target = $region21
    $region20: #{tpu_custom_call.1} parent=1 // pred_region
      %48 = vst [vmem:[#allocation2] sm:$0xff] 0.0
    $region21: #{tpu_custom_call.1} parent=1 // pred_fallthru
      _
    %v49 = vld [vmem:[#allocation2] sm:$0xff]
    %v50 = vadd.f32 %v49, %v43
    %51 = vst [vmem:[#allocation2] sm:$0xff] %v50
    // Predicated region
    $region22: #{tpu_custom_call.1} parent=1 // pred_check
      %p52 = pneg %p44
    $region23: #{tpu_custom_call.1} parent=1 // pred_check_branch
      %54 = sbr.rel (%p52) target = $region25
    $region24: #{tpu_custom_call.1} parent=1 // pred_region
      %v55 = vld [vmem:[#allocation2] sm:$0xff]
      %57 = vst [vmem:[#allocation1] ss:$4 sm:$0xff] %v55
      %v58 = vld.sshfl [vmem:[#allocation1] sm:$0xff pattern:$0x73625140]
      %v59 = vld.sshfl [vmem:[#allocation1 + $0x8] sm:$0xff pattern:$0x73625140]
      %vm62 = vcmask 1041408
      %v63 = vsel %vm62, %v58, 0.0
      %v64 = vsel %vm62, %v59, 0.0
      %v65 = vadd.f32 %v63, %v64
      %66 = vadd.xlane.f32.xlu0 %v65
      %v67 = vpop.xlane.xlu0 %66
      %v68 = vrot.slane %v67, 4
      %v69 = vadd.f32 %v67, %v68
      %v70 = vrot.slane %v69, 2
      %v71 = vadd.f32 %v69, %v70
      %v72 = vrot.slane %v71, 1
      %v73 = vadd.f32 %v71, %v72
      %s74 = vtos %v73
      %v75 = vrot.slane %v55, 4
      %76 = vst [vmem:[#allocation1] ss:$4 sm:$0xff] %v75
      %v77 = vld.sshfl [vmem:[#allocation1] sm:$0xff pattern:$0x73625140]
      %v78 = vld.sshfl [vmem:[#allocation1 + $0x8] sm:$0xff pattern:$0x73625140]
      %v81 = vsel %vm62, %v77, 0.0
      %v82 = vsel %vm62, %v78, 0.0
      %v83 = vadd.f32 %v81, %v82
      %84 = vadd.xlane.f32.xlu0 %v83
      %v85 = vpop.xlane.xlu0 %84
      %v86 = vrot.slane %v85, 4
      %v87 = vadd.f32 %v85, %v86
      %v88 = vrot.slane %v87, 2
      %v89 = vadd.f32 %v87, %v88
      %v90 = vrot.slane %v89, 1
      %v91 = vadd.f32 %v89, %v90
      %s92 = vtos %v91
      %s93 = smul.f32 %s74, 0.001953125
      %s94 = smul.f32 %s92, 0.001953125
      %s95 = sadd.f32 %s93, %s94
      %s96 = scalar_lea.smem [#allocation8], 0
      %97 = sst [smem:[%s96]] %s95
    $region25: #{tpu_custom_call.1} parent=1 // pred_fallthru
      _
    // Predicated region
    $region26: #{tpu_custom_call.1} parent=1 // pred_check
      _
    $region27: #{tpu_custom_call.1} parent=1 // pred_check_branch
      %99 = sbr.rel (0) target = $region29
    $region28: #{tpu_custom_call.1} parent=1 // pred_region
      %101 = vsyncadd [#allocation5], 0
      %s103 = sshll.u32 %s2, 4
      %s104 = int_to_ptr.hbm [resolvable:$true] %s103
      %106 = dma.smem_to_hbm [#allocation8], 16, %s104, [#allocation5]
    $region29: #{tpu_custom_call.1} parent=1 // pred_fallthru
      _
    // Predicated region
    $region30: #{tpu_custom_call.1} parent=1 // pred_check
      _
    $region31: #{tpu_custom_call.1} parent=1 // pred_check_branch
      %108 = sbr.rel (0) target = $region33
    $region32: #{tpu_custom_call.1} parent=1 // pred_region
      %110 = dma.done [#allocation5], 16
    $region33: #{tpu_custom_call.1} parent=1 // pred_fallthru
      _
    %111 = sfence
    %112 = vsyncpa [#allocation4], 1
    %113 = vsyncpa [#allocation7], 1
    %114 = vsyncpa [#allocation5], 1

</llo_original>
